<compile_context>
chip_gen: v6e
topology: v6e:2x2x1
jax: 0.10.0
libtpu: 0.0.40
codegen_flags: <defaults>
</compile_context>

<pallas_src>
import functools

import jax
import jax.numpy as jnp
from jax.experimental import pallas as pl
from jax.experimental.pallas import tpu as pltpu

CONFIDENCE = 50.0
NUM_CLASSES = 10


def _cw_loss_kernel(logits_ref, target_ref, out_ref, *, total_b, tile_b, confidence):
    # logits_ref: (TILE_B, C) native dtype   (natural layout, classes on lanes)
    # target_ref: (TILE_B, 1) int32
    # out_ref:    (1, 8, 128) f32 — this tile's partial sum, broadcast-filled
    i = pl.program_id(0)

    logits = logits_ref[...].astype(jnp.float32)                       # (TILE_B, C)
    tgt = target_ref[...]                                              # (TILE_B, 1)

    # one-hot-free selects: eq[b, c] == (c == target[b])
    class_ids = jax.lax.broadcasted_iota(jnp.int32, logits.shape, 1)   # (TILE_B, C)
    eq = class_ids == tgt                                              # (TILE_B, C)

    # real: logit of the true class (lane-axis sum of the selected entry)
    real = jnp.sum(jnp.where(eq, logits, 0.0), axis=1, keepdims=True)         # (TILE_B, 1)
    # other: max over non-target classes (target class pushed to -10000, as in ref)
    other = jnp.max(jnp.where(eq, -10000.0, logits), axis=1, keepdims=True)   # (TILE_B, 1)

    loss = -jnp.maximum(real - other + confidence, 0.0)                # (TILE_B, 1)

    # mask out padded rows of the last (partial) tile BEFORE reducing
    row = jax.lax.broadcasted_iota(jnp.int32, loss.shape, 0) + i * tile_b
    loss = jnp.where(row < total_b, loss, 0.0)

    partial = jnp.sum(loss)                                            # scalar f32
    out_ref[...] = jnp.full(out_ref.shape, partial, dtype=out_ref.dtype)


def _pick_tile_b(B, logit_itemsize):
    """Rows per tile, sized from a ~16 MiB double-buffered VMEM budget.

    VMEM cost per row (lane-padded to 128):
      logits (row, C<=128) -> 128 * itemsize bytes
      target (row, 1) i32  -> 128 * 4       bytes
    """
    per_row_bytes = 128 * logit_itemsize + 128 * 4
    budget_bytes = 16 * 1024 * 1024          # total, across 2 pipeline buffers
    tile = budget_bytes // (2 * per_row_bytes)
    tile = (tile // 128) * 128               # keep it vreg-friendly
    tile = max(tile, 8)
    b_pad = ((B + 7) // 8) * 8               # no point exceeding (padded) B
    tile = min(tile, b_pad)
    tile = ((tile + 7) // 8) * 8             # sublane-dim multiple of 8
    return max(tile, 8)


def cw_loss(logits: jax.Array, target: jax.Array, confidence: float = CONFIDENCE) -> jax.Array:
    """logits: [B, C] float (any TPU dtype), target: [B] int -> scalar float32 CW loss."""
    B, C = logits.shape
    target2d = target.astype(jnp.int32).reshape(B, 1)   # contiguous reshape, no HBM pass

    tile_b = _pick_tile_b(B, jnp.dtype(logits.dtype).itemsize)
    num_tiles = pl.cdiv(B, tile_b)

    kernel = functools.partial(
        _cw_loss_kernel, total_b=B, tile_b=tile_b, confidence=float(confidence))

    partials = pl.pallas_call(
        kernel,
        out_shape=jax.ShapeDtypeStruct((num_tiles, 8, 128), jnp.float32),
        grid_spec=pltpu.PrefetchScalarGridSpec(
            num_scalar_prefetch=0,
            grid=(num_tiles,),
            in_specs=[
                pl.BlockSpec((tile_b, C), lambda i: (i, 0)),   # logits tile (natural layout)
                pl.BlockSpec((tile_b, 1), lambda i: (i, 0)),   # targets tile
            ],
            # each tile owns its own (8,128)-aligned output block -> no cross-step dep
            out_specs=pl.BlockSpec((1, 8, 128), lambda i: (i, 0, 0)),
        ),
        compiler_params=pltpu.CompilerParams(
            dimension_semantics=("parallel",),   # independent tiles -> megacore-shardable
            vmem_limit_bytes=32 * 1024 * 1024,
        ),
    )(logits, target2d)

    # wrapper-side reduction of num_tiles partial sums (negligible)
    return jnp.sum(partials[:, 0, 0])


def _reference(logits, target, confidence=CONFIDENCE):
    # pure-JAX reference mirroring the PyTorch code
    C = logits.shape[1]
    onehot = jax.nn.one_hot(target, C, dtype=jnp.float32)
    lf = logits.astype(jnp.float32)
    real = jnp.sum(onehot * lf, axis=1)
    other = jnp.max((1.0 - onehot) * lf - onehot * 10000.0, axis=1)
    return jnp.sum(-jnp.maximum(real - other + confidence, 0.0))


if __name__ == "__main__":
    key = jax.random.PRNGKey(0)
    k1, k2 = jax.random.split(key)
    B = 8
    logits = jax.random.normal(k1, (B, NUM_CLASSES), dtype=jnp.float32) * 5.0
    target = jax.random.randint(k2, (B,), 0, NUM_CLASSES, dtype=jnp.int32)

    out = cw_loss(logits, target)
    out = jax.block_until_ready(out)

    ref = _reference(logits, target)
    assert jnp.allclose(out, ref, atol=1e-4, rtol=1e-4), (out, ref)
    print("KERNEL_OK")
</pallas_src>

<mosaic_0001>
module attributes {stable_mosaic.version = 11 : i64} {
  func.func @_cw_loss_kernel(%arg0: i32, %arg1: memref<8x10xf32, #tpu.memory_space<vmem>>, %arg2: memref<8x1xi32, #tpu.memory_space<vmem>>, %arg3: memref<1x8x128xf32, #tpu.memory_space<vmem>>) attributes {dimension_semantics = [#tpu.dimension_semantics<parallel>], iteration_bounds = array<i64: 1>, scalar_prefetch = 0 : i64, scratch_operands = 0 : i64, tpu.core_type = #tpu.core_type<tc>, window_params = [{transform_indices = @transform_0, window_bounds = array<i64: 8, 10>}, {transform_indices = @transform_1, window_bounds = array<i64: 8, 1>}, {transform_indices = @transform_2, window_bounds = array<i64: 1, 8, 128>}]} {
    %c0 = arith.constant 0 : index
    %c0_0 = arith.constant 0 : index
    %0 = vector.load %arg1[%c0, %c0_0] : memref<8x10xf32, #tpu.memory_space<vmem>>, vector<8x10xf32>
    %c0_1 = arith.constant 0 : index
    %c0_2 = arith.constant 0 : index
    %1 = vector.load %arg2[%c0_1, %c0_2] : memref<8x1xi32, #tpu.memory_space<vmem>>, vector<8x1xi32>
    %2 = tpu.iota {dimensions = array<i32: 1>} : vector<8x10xi32>
    %3 = vector.broadcast %1 : vector<8x1xi32> to vector<8x10xi32>
    %4 = arith.cmpi eq, %2, %3 : vector<8x10xi32>
    %cst = arith.constant 0.000000e+00 : f32
    %5 = vector.broadcast %cst : f32 to vector<8x10xf32>
    %6 = arith.select %4, %0, %5 : vector<8x10xi1>, vector<8x10xf32>
    %cst_3 = arith.constant dense<0.000000e+00> : vector<8xf32>
    %7 = vector.multi_reduction <add>, %6, %cst_3 [1] : vector<8x10xf32> to vector<8xf32>
    %8 = vector.shape_cast %7 : vector<8xf32> to vector<8x1xf32>
    %cst_4 = arith.constant -1.000000e+04 : f32
    %9 = vector.broadcast %cst_4 : f32 to vector<8x10xf32>
    %10 = arith.select %4, %9, %0 : vector<8x10xi1>, vector<8x10xf32>
    %cst_5 = arith.constant dense<0xFF800000> : vector<8xf32>
    %11 = vector.multi_reduction <maximumf>, %10, %cst_5 [1] : vector<8x10xf32> to vector<8xf32>
    %12 = vector.shape_cast %11 : vector<8xf32> to vector<8x1xf32>
    %13 = arith.subf %8, %12 : vector<8x1xf32>
    %cst_6 = arith.constant 5.000000e+01 : f32
    %14 = vector.broadcast %cst_6 : f32 to vector<8x1xf32>
    %15 = arith.addf %13, %14 : vector<8x1xf32>
    %cst_7 = arith.constant 0.000000e+00 : f32
    %16 = vector.broadcast %cst_7 : f32 to vector<8x1xf32>
    %17 = arith.maximumf %15, %16 : vector<8x1xf32>
    %cst_8 = arith.constant 0.000000e+00 : f32
    %18 = vector.broadcast %cst_8 : f32 to vector<8x1xf32>
    %19 = arith.subf %18, %17 : vector<8x1xf32>
    %20 = tpu.iota {dimensions = array<i32: 0>} : vector<8x1xi32>
    %c8_i32 = arith.constant 8 : i32
    %21 = arith.muli %arg0, %c8_i32 : i32
    %22 = vector.broadcast %21 : i32 to vector<8x1xi32>
    %23 = arith.addi %20, %22 : vector<8x1xi32>
    %c8_i32_9 = arith.constant 8 : i32
    %24 = vector.broadcast %c8_i32_9 : i32 to vector<8x1xi32>
    %25 = arith.cmpi slt, %23, %24 : vector<8x1xi32>
    %cst_10 = arith.constant 0.000000e+00 : f32
    %26 = vector.broadcast %cst_10 : f32 to vector<8x1xf32>
    %27 = arith.select %25, %19, %26 : vector<8x1xi1>, vector<8x1xf32>
    %28 = vector.shape_cast %27 : vector<8x1xf32> to vector<1x8x1xf32>
    %cst_11 = arith.constant dense<0.000000e+00> : vector<1xf32>
    %29 = vector.multi_reduction <add>, %28, %cst_11 [1, 2] : vector<1x8x1xf32> to vector<1xf32>
    %30 = vector.shape_cast %29 : vector<1xf32> to vector<1x1x1xf32>
    %31 = vector.extract %30[0, 0, 0] : f32 from vector<1x1x1xf32>
    %32 = vector.broadcast %31 : f32 to vector<1x8x128xf32>
    %c0_12 = arith.constant 0 : index
    %c0_13 = arith.constant 0 : index
    %c0_14 = arith.constant 0 : index
    %33 = vector.load %arg3[%c0_12, %c0_13, %c0_14] : memref<1x8x128xf32, #tpu.memory_space<vmem>>, vector<1x8x128xf32>
    tpu.vector_store %arg3[%c0_12, %c0_13, %c0_14], %32 {strides = array<i32>} : memref<1x8x128xf32, #tpu.memory_space<vmem>>, vector<1x8x128xf32>,
    return
  }
  func.func @transform_0(%arg0: i32) -> (i32, i32) {
    %c0_i32 = arith.constant 0 : i32
    %c0_i32_0 = arith.constant 0 : i32
    return %arg0, %c0_i32 : i32, i32
  }
  func.func @transform_1(%arg0: i32) -> (i32, i32) {
    %c0_i32 = arith.constant 0 : i32
    %c0_i32_0 = arith.constant 0 : i32
    return %arg0, %c0_i32 : i32, i32
  }
  func.func @transform_2(%arg0: i32) -> (i32, i32, i32) {
    %c0_i32 = arith.constant 0 : i32
    %c0_i32_0 = arith.constant 0 : i32
    %c0_i32_1 = arith.constant 0 : i32
    return %arg0, %c0_i32, %c0_i32_0 : i32, i32, i32
  }
}

</mosaic_0001>

<llo_original>
// kernel: tpu_custom_call.1
$region0: #{tpu_custom_call.1}
  #allocation0 [shape = 'u32[]', space=smem, size = 0x4, offset = 0x4, fixed_abs, tag = 'smem constant byte address 0x4 - core index']
  #allocation1 [shape = 'u32[144,128]{1,0:T(1,128)}', space=vmem, size = 0x12000, scoped, tag = 'internal scratch']
  %s0 = inlined_call_operand.vmem [shape: f32[8,10], index: 0, kind: input, shape index: {}]
  %s1 = inlined_call_operand.vmem [shape: s32[8,1], index: 1, kind: input, shape index: {}]
  %s2 = inlined_call_operand.hbm [shape: f32[1,8,128], index: 2, kind: output, shape index: {}]
  %s3 = sld [smem:[#allocation0]]
  $region18: #{tpu_custom_call.1} parent=0
    _
  %s5 = ssub.s32 1, %s3
  %s6 = scalar_select 0, %s5, %s3
  $region1: #{tpu_custom_call.1} parent=0
    #allocation2 [shape = 'u8[4096]{0}', space=vmem, size = 0x1000, scoped, tag = 'output window, operand 0, single buffered']
    #allocation3 [shape = 's32[1]{0}', space=sflag, size = 0x4, scoped, tag = 'scoped memory for tpu_custom_call.1']
    %7 = vsyncpa [#allocation3], 0
    // Predicated region
    $region2: #{tpu_custom_call.1} parent=1 // pred_check
      _
    $region3: #{tpu_custom_call.1} parent=1 // pred_check_branch
      %9 = sbr.rel (0) target = $region5
    $region4: #{tpu_custom_call.1} parent=1 // pred_region
      _
    $region5: #{tpu_custom_call.1} parent=1 // pred_fallthru
      _
    // Predicated region
    $region6: #{tpu_custom_call.1} parent=1 // pred_check
      _
    $region7: #{tpu_custom_call.1} parent=1 // pred_check_branch
      %11 = sbr.rel (0) target = $region9
    $region8: #{tpu_custom_call.1} parent=1 // pred_region
      _
    $region9: #{tpu_custom_call.1} parent=1 // pred_fallthru
      _
    %v12 = vld [vmem:[%s0] sm:$0xff]
    %v13 = vld [vmem:[%s1] sm:$0xff]
    %v14 = vlaneseq
    %v15 = vand.u32 %v14, 127
    %16 = vset.pattern.permute.xlu0 0
    %17 = vperm.xlu0 %16, %v13
    %v18 = vpop.permute.xlu0 %17
    %vm19 = vcmp.eq.s32.totalorder %v15, %v18
    %v20 = vsel %vm19, %v12, 0.0
    %vm21 = vcmask 80896
    %v22 = vsel %vm21, %v20, 0.0
    %23 = vadd.xlane.f32.xlu0 %v22
    %v24 = vpop.xlane.xlu0 %23
    %v25 = vsel %vm19, -10000.0, %v12
    %v26 = vsel %vm21, %v25, -inf
    %27 = vmax.xlane.f32.xlu0 %v26
    %v28 = vpop.xlane.xlu0 %27
    %v29 = vsub.f32 %v24, %v28
    %v30 = vadd.f32 %v29, 50.0
    %v31 = vmax.f32 %v30, 0.0
    %v32 = vsub.f32 0.0, %v31
    %v33 = vlaneseq
    %v34 = vshrl.u32 %v33, 7
    %s35 = smul.u32 0, 8
    %v36 = vstv %s35
    %v37 = vadd.s32 %v34, %v36
    %vm38 = vcmp.lt.s32.totalorder %v37, 8
    %v39 = vsel %vm38, %v32, 0.0
    %vm40 = vcmask 7168
    %v41 = vsel %vm40, %v39, 0.0
    %42 = vadd.xlane.f32.xlu0 %v41
    %v43 = vpop.xlane.xlu0 %42
    %v44 = vrot.slane %v43, 4
    %v45 = vadd.f32 %v43, %v44
    %v46 = vrot.slane %v45, 2
    %v47 = vadd.f32 %v45, %v46
    %v48 = vrot.slane %v47, 1
    %v49 = vadd.f32 %v47, %v48
    %s50 = vtos %v49
    %v51 = vstv %s50
    %52 = vst [vmem:[#allocation2] sm:$0xff] %v51
    // Predicated region
    $region10: #{tpu_custom_call.1} parent=1 // pred_check
      _
    $region11: #{tpu_custom_call.1} parent=1 // pred_check_branch
      %54 = sbr.rel (0) target = $region13
    $region12: #{tpu_custom_call.1} parent=1 // pred_region
      %s56 = ssub.s32 128, 128
      %57 = vsyncadd [#allocation3], %s56
      %s59 = sshll.u32 [#allocation2], 4
      %s60 = int_to_ptr.vmem [resolvable:$true] %s59
      %62 = dma.vmem_to_hbm [thread:$0]  %s60, 128, %s2, [#allocation3]
    $region13: #{tpu_custom_call.1} parent=1 // pred_fallthru
      _
    // Predicated region
    $region14: #{tpu_custom_call.1} parent=1 // pred_check
      _
    $region15: #{tpu_custom_call.1} parent=1 // pred_check_branch
      %64 = sbr.rel (0) target = $region17
    $region16: #{tpu_custom_call.1} parent=1 // pred_region
      %65 = dma.done [#allocation3], 128
    $region17: #{tpu_custom_call.1} parent=1 // pred_fallthru
      _
    %66 = vsyncpa [#allocation3], 1

</llo_original>
